<compile_context>
chip_gen: v7x
topology: tpu7x:2x2x1
jax: 0.10.0
libtpu: 0.0.40
codegen_flags: <defaults>
</compile_context>

<pallas_src>
import jax
import jax.numpy as jnp
from jax.experimental import pallas as pl
from jax.experimental.pallas import tpu as pltpu

# Block config of the torch module: (In_channel, Med_channel, stride)
CFG = [(64, 64, 1), (64, 64, 1), (64, 128, 2), (128, 128, 1),
       (128, 256, 2), (256, 256, 1), (256, 512, 2), (512, 512, 1)]

ACT_DTYPE = jnp.bfloat16        # inter-kernel activation storage dtype


# ------------------------------ small helpers ------------------------------

def _round_up(x, m):
    return (x + m - 1) // m * m


def _pad2(x, m0, m1):
    p0 = _round_up(x.shape[0], m0) - x.shape[0]
    p1 = _round_up(x.shape[1], m1) - x.shape[1]
    if p0 == 0 and p1 == 0:
        return x
    return jnp.pad(x, ((0, p0), (0, p1)))


def _mm_tiles(M, K, N):
    """MXU-friendly tiles: 128 minimum, 256 on dims that are large enough."""
    tm = 256 if M > 128 else 128
    tk = 256 if K > 128 else 128
    tn = 256 if N > 128 else 128
    return tm, tk, tn


def _row_tiling(M, cap=512):
    """Row tile for mem-bound elementwise kernels (cap keeps v7x VMEM safe)."""
    if M <= cap:
        Mp = _round_up(M, 16)          # bf16 sublane packing = 16 rows
        return Mp, Mp
    return _round_up(M, cap), cap


# ------------------------------ Pallas kernels ------------------------------

def matmul_bias_kernel(x_ref, w_ref, b_ref, o_ref, acc_ref):
    # grid = (i, j, k); accumulator initialised with the bias (saves the
    # finalize add), f32 accumulation, bf16 inputs/output.
    @pl.when(pl.program_id(2) == 0)
    def _():
        acc_ref[...] = jnp.broadcast_to(b_ref[...], acc_ref.shape)

    acc_ref[...] += jnp.dot(x_ref[...], w_ref[...],
                            preferred_element_type=jnp.float32)

    @pl.when(pl.program_id(2) == pl.num_programs(2) - 1)
    def _():
        o_ref[...] = acc_ref[...].astype(o_ref.dtype)


def matmul_stats_kernel(x_ref, w_ref, o_ref, sum_ref, sq_ref,
                        acc_ref, s_acc, q_acc):
    # grid = (j, i, k): j over output-channel tiles (parallel), i over row
    # tiles, k over the reduction.  BN batch statistics (per-channel sum and
    # sum of squares of the bf16-rounded activation) are accumulated across
    # i in VMEM scratch -> the conv output is never re-read for BN stats.
    i = pl.program_id(1)
    k = pl.program_id(2)
    ni = pl.num_programs(1)
    nk = pl.num_programs(2)

    @pl.when(jnp.logical_and(i == 0, k == 0))
    def _():
        s_acc[...] = jnp.zeros_like(s_acc)
        q_acc[...] = jnp.zeros_like(q_acc)

    @pl.when(k == 0)
    def _():
        acc_ref[...] = jnp.zeros_like(acc_ref)

    acc_ref[...] += jnp.dot(x_ref[...], w_ref[...],
                            preferred_element_type=jnp.float32)

    @pl.when(k == nk - 1)
    def _():
        yb = acc_ref[...].astype(o_ref.dtype)
        o_ref[...] = yb
        yf = yb.astype(jnp.float32)
        s_acc[...] += jnp.sum(yf, axis=0, keepdims=True)
        q_acc[...] += jnp.sum(yf * yf, axis=0, keepdims=True)

    @pl.when(jnp.logical_and(i == ni - 1, k == nk - 1))
    def _():
        sum_ref[...] = s_acc[...]
        sq_ref[...] = q_acc[...]


def bn_relu_kernel(x_ref, scale_ref, shift_ref, o_ref):
    y = x_ref[...].astype(jnp.float32) * scale_ref[...] + shift_ref[...]
    o_ref[...] = jnp.maximum(y, 0.0).astype(o_ref.dtype)


def bn_relu_add_kernel(x_ref, scale_ref, shift_ref, res_ref, o_ref):
    y = x_ref[...].astype(jnp.float32) * scale_ref[...] + shift_ref[...]
    y = jnp.maximum(y, 0.0) + res_ref[...].astype(jnp.float32)
    o_ref[...] = y.astype(o_ref.dtype)


def max3_kernel(a_ref, b_ref, c_ref, o_ref):
    o_ref[...] = jnp.maximum(jnp.maximum(a_ref[...], b_ref[...]), c_ref[...])


# ------------------------------ Pallas wrappers -----------------------------

def pallas_matmul_bias(x, w, b):
    """bf16 (M,K) @ (K,N) + b -> bf16 (M,N), f32 accumulation."""
    M, K = x.shape
    N = w.shape[1]
    tm, tk, tn = _mm_tiles(M, K, N)
    xp = _pad2(x.astype(ACT_DTYPE), tm, tk)
    wp = _pad2(w.astype(ACT_DTYPE), tk, tn)
    bp = jnp.pad(b.astype(jnp.float32),
                 (0, _round_up(N, tn) - N)).reshape(1, -1)
    Mp, Kp = xp.shape
    Np = wp.shape[1]
    out = pl.pallas_call(
        matmul_bias_kernel,
        out_shape=jax.ShapeDtypeStruct((Mp, Np), ACT_DTYPE),
        grid_spec=pltpu.PrefetchScalarGridSpec(
            num_scalar_prefetch=0,
            grid=(Mp // tm, Np // tn, Kp // tk),
            in_specs=[pl.BlockSpec((tm, tk), lambda i, j, k: (i, k)),
                      pl.BlockSpec((tk, tn), lambda i, j, k: (k, j)),
                      pl.BlockSpec((1, tn), lambda i, j, k: (0, j))],
            out_specs=pl.BlockSpec((tm, tn), lambda i, j, k: (i, j)),
            scratch_shapes=[pltpu.VMEM((tm, tn), jnp.float32)]),
        compiler_params=pltpu.CompilerParams(
            dimension_semantics=("parallel", "parallel", "arbitrary")),
    )(xp, wp, bp)
    return out[:M, :N]


def pallas_matmul_stats(x, w):
    """bf16 (M,K)@(K,N) -> (bf16 (M,N), f32 column sum, f32 column sum-sq)."""
    M, K = x.shape
    N = w.shape[1]
    tm, tk, tn = _mm_tiles(M, K, N)
    xp = _pad2(x.astype(ACT_DTYPE), tm, tk)
    wp = _pad2(w.astype(ACT_DTYPE), tk, tn)
    Mp, Kp = xp.shape
    Np = wp.shape[1]
    y, s, q = pl.pallas_call(
        matmul_stats_kernel,
        out_shape=(jax.ShapeDtypeStruct((Mp, Np), ACT_DTYPE),
                   jax.ShapeDtypeStruct((1, Np), jnp.float32),
                   jax.ShapeDtypeStruct((1, Np), jnp.float32)),
        grid_spec=pltpu.PrefetchScalarGridSpec(
            num_scalar_prefetch=0,
            grid=(Np // tn, Mp // tm, Kp // tk),
            in_specs=[pl.BlockSpec((tm, tk), lambda j, i, k: (i, k)),
                      pl.BlockSpec((tk, tn), lambda j, i, k: (k, j))],
            out_specs=(pl.BlockSpec((tm, tn), lambda j, i, k: (i, j)),
                       pl.BlockSpec((1, tn), lambda j, i, k: (0, j)),
                       pl.BlockSpec((1, tn), lambda j, i, k: (0, j))),
            scratch_shapes=[pltpu.VMEM((tm, tn), jnp.float32),
                            pltpu.VMEM((1, tn), jnp.float32),
                            pltpu.VMEM((1, tn), jnp.float32)]),
        compiler_params=pltpu.CompilerParams(
            dimension_semantics=("parallel", "arbitrary", "arbitrary")),
    )(xp, wp)
    return y[:M, :N], s[0, :N], q[0, :N]


def pallas_scale_shift_relu(x, scale, shift, res=None):
    """y = relu(x*scale + shift) [+ res]; x/res bf16, scale/shift f32."""
    M, C = x.shape
    Mp, rb = _row_tiling(M)
    Cp = _round_up(C, 128)
    xp = jnp.pad(x.astype(ACT_DTYPE), ((0, Mp - M), (0, Cp - C)))
    sp = jnp.pad(scale.astype(jnp.float32), (0, Cp - C)).reshape(1, -1)
    hp = jnp.pad(shift.astype(jnp.float32), (0, Cp - C)).reshape(1, -1)
    ins = [xp, sp, hp]
    specs = [pl.BlockSpec((rb, Cp), lambda i: (i, 0)),
             pl.BlockSpec((1, Cp), lambda i: (0, 0)),
             pl.BlockSpec((1, Cp), lambda i: (0, 0))]
    if res is not None:
        ins.append(jnp.pad(res.astype(ACT_DTYPE), ((0, Mp - M), (0, Cp - C))))
        specs.append(pl.BlockSpec((rb, Cp), lambda i: (i, 0)))
        kern = bn_relu_add_kernel
    else:
        kern = bn_relu_kernel
    out = pl.pallas_call(
        kern,
        out_shape=jax.ShapeDtypeStruct((Mp, Cp), ACT_DTYPE),
        grid_spec=pltpu.PrefetchScalarGridSpec(
            num_scalar_prefetch=0,
            grid=(Mp // rb,),
            in_specs=specs,
            out_specs=pl.BlockSpec((rb, Cp), lambda i: (i, 0))),
        compiler_params=pltpu.CompilerParams(
            dimension_semantics=("parallel",)),
    )(*ins)
    return out[:M, :C]


def pallas_max3(a, b, c):
    M, C = a.shape
    Mp, rb = _row_tiling(M)
    Cp = _round_up(C, 128)
    ap, bp, cp = (jnp.pad(t.astype(ACT_DTYPE), ((0, Mp - M), (0, Cp - C)))
                  for t in (a, b, c))
    out = pl.pallas_call(
        max3_kernel,
        out_shape=jax.ShapeDtypeStruct((Mp, Cp), ACT_DTYPE),
        grid_spec=pltpu.PrefetchScalarGridSpec(
            num_scalar_prefetch=0,
            grid=(Mp // rb,),
            in_specs=[pl.BlockSpec((rb, Cp), lambda i: (i, 0))] * 3,
            out_specs=pl.BlockSpec((rb, Cp), lambda i: (i, 0))),
        compiler_params=pltpu.CompilerParams(
            dimension_semantics=("parallel",)),
    )(ap, bp, cp)
    return out[:M, :C]


# ------------------------------- model glue ---------------------------------

def _matmul_bias(x, w, b, use_pallas):
    if use_pallas:
        return pallas_matmul_bias(x, w, b)
    y = jnp.dot(x.astype(ACT_DTYPE), w.astype(ACT_DTYPE),
                preferred_element_type=jnp.float32) + b.astype(jnp.float32)
    return y.astype(ACT_DTYPE)


def _matmul_stats(x, w, use_pallas):
    if use_pallas:
        return pallas_matmul_stats(x, w)
    y = jnp.dot(x.astype(ACT_DTYPE), w.astype(ACT_DTYPE),
                preferred_element_type=jnp.float32)
    yb = y.astype(ACT_DTYPE)
    yf = yb.astype(jnp.float32)
    return yb, jnp.sum(yf, axis=0), jnp.sum(yf * yf, axis=0)


def _im2col(x, k, stride, padding):
    """x: (N, L, Cin) -> ((N*Lout, k*Cin) tap-major columns, Lout)."""
    N, L, Cin = x.shape
    xp = jnp.pad(x, ((0, 0), (padding, padding), (0, 0)))
    Lout = (L + 2 * padding - k) // stride + 1
    cols = jnp.concatenate(
        [xp[:, j: j + stride * (Lout - 1) + 1: stride, :] for j in range(k)],
        axis=2)
    return cols.reshape(N * Lout, k * Cin), Lout


def conv1d_bias(x, w, b, stride, padding, use_pallas):
    """Conv1d used where no BatchNorm follows (stem / residual 1x1 path)."""
    N = x.shape[0]
    Cout, Cin, k = w.shape
    cols, Lout = _im2col(x, k, stride, padding)
    w2 = jnp.transpose(w, (2, 1, 0)).reshape(k * Cin, Cout)
    y = _matmul_bias(cols, w2, b, use_pallas)
    return y.reshape(N, Lout, Cout)


def conv1d_bn_relu(x, w, gamma, beta, stride, padding, residual, use_pallas,
                   eps=1e-5):
    """Conv1d + BatchNorm1d (training-mode batch stats) + ReLU [+ residual].

    The conv bias is dropped (it cancels exactly in training-mode BN), and
    the BN statistics come out of the fused matmul epilogue.
    """
    N, L, Cin = x.shape
    Cout, _, k = w.shape
    cols, Lout = _im2col(x, k, stride, padding)
    w2 = jnp.transpose(w, (2, 1, 0)).reshape(k * Cin, Cout)
    y, s, q = _matmul_stats(cols, w2, use_pallas)
    M = N * Lout
    mean = s / M
    var = jnp.maximum(q / M - mean * mean, 0.0)     # biased batch variance
    scale = gamma.astype(jnp.float32) / jnp.sqrt(var + eps)
    shift = beta.astype(jnp.float32) - mean * scale
    res2 = None if residual is None else residual.reshape(M, Cout)
    if use_pallas:
        out = pallas_scale_shift_relu(y, scale, shift, res2)
    else:
        o = jnp.maximum(y.astype(jnp.float32) * scale + shift, 0.0)
        if res2 is not None:
            o = o + res2.astype(jnp.float32)
        out = o.astype(ACT_DTYPE)
    return out.reshape(N, Lout, Cout)


def maxpool1d_k3s2p1(x, use_pallas):
    N, L, C = x.shape
    xp = jnp.pad(x, ((0, 0), (1, 1), (0, 0)), constant_values=-jnp.inf)
    Lout = (L + 2 - 3) // 2 + 1
    taps = [xp[:, j: j + 2 * (Lout - 1) + 1: 2, :].reshape(N * Lout, C)
            for j in range(3)]
    if use_pallas:
        y = pallas_max3(*taps)
    else:
        y = jnp.maximum(jnp.maximum(taps[0], taps[1]), taps[2])
    return y.reshape(N, Lout, C)


def bottleneck(x, bp, stride, use_pallas):
    N, L, Cin = x.shape
    if bp["res_w"] is not None:                  # 1x1 conv, stride `stride`
        Lout = (L - 1) // stride + 1
        xs = x[:, 0:(Lout - 1) * stride + 1: stride, :].reshape(N * Lout, Cin)
        res = _matmul_bias(xs, bp["res_w"][:, :, 0].T, bp["res_b"], use_pallas)
        res = res.reshape(N, Lout, -1)
    else:
        res = x
    # NOTE: bp["b1"]/bp["b2"] exist (torch parity) but are unused: a conv
    # bias directly before training-mode BatchNorm cancels exactly.
    h = conv1d_bn_relu(x, bp["w1"], bp["g1"], bp["be1"], stride, 1, None,
                       use_pallas)
    h = conv1d_bn_relu(h, bp["w2"], bp["g2"], bp["be2"], 1, 1, res, use_pallas)
    return h


def resnet18_forward(x_ncl, params, use_pallas=True):
    x = jnp.transpose(x_ncl, (0, 2, 1)).astype(ACT_DTYPE)       # NCL -> NLC
    x = conv1d_bias(x, params["stem_w"], params["stem_b"], 2, 3, use_pallas)
    x = maxpool1d_k3s2p1(x, use_pallas)
    for bp, (_, _, stride) in zip(params["blocks"], CFG):
        x = bottleneck(x, bp, stride, use_pallas)
    # torch: x.permute(0, 2, 1) -> (N, L, 512); we are already channels-last.
    N, L, C = x.shape
    h = x.reshape(N * L, C)
    h = _matmul_bias(h, params["fc1_w"].T, params["fc1_b"], use_pallas)
    h = _matmul_bias(h, params["fc2_w"].T, params["fc2_b"], use_pallas)
    return h.reshape(N, L, -1).astype(jnp.float32)


# ----------------------------- parameter init -------------------------------

def init_params(key, in_channels=2, classes=5):
    keys = iter(jax.random.split(key, 64))

    def conv_p(cin, cout, k):
        w = jax.random.normal(next(keys), (cout, cin, k),
                              jnp.float32) / jnp.sqrt(cin * k)
        b = 0.01 * jax.random.normal(next(keys), (cout,), jnp.float32)
        return w, b

    params = {}
    params["stem_w"], params["stem_b"] = conv_p(in_channels, 64, 7)
    blocks = []
    for cin, cmed, _ in CFG:
        bp = {}
        bp["w1"], bp["b1"] = conv_p(cin, cmed, 3)
        bp["g1"] = jnp.ones((cmed,), jnp.float32)
        bp["be1"] = jnp.zeros((cmed,), jnp.float32)
        bp["w2"], bp["b2"] = conv_p(cmed, cmed, 3)
        bp["g2"] = jnp.ones((cmed,), jnp.float32)
        bp["be2"] = jnp.zeros((cmed,), jnp.float32)
        if cin != cmed:
            bp["res_w"], bp["res_b"] = conv_p(cin, cmed, 1)
        else:
            bp["res_w"], bp["res_b"] = None, None
        blocks.append(bp)
    params["blocks"] = blocks
    params["fc1_w"] = jax.random.normal(next(keys), (256, 512),
                                        jnp.float32) / jnp.sqrt(512)
    params["fc1_b"] = 0.01 * jax.random.normal(next(keys), (256,), jnp.float32)
    params["fc2_w"] = jax.random.normal(next(keys), (classes, 256),
                                        jnp.float32) / jnp.sqrt(256)
    params["fc2_b"] = 0.01 * jax.random.normal(next(keys), (classes,),
                                               jnp.float32)
    return params


if __name__ == "__main__":
    key = jax.random.PRNGKey(0)
    kx, kp = jax.random.split(key)
    # PyTorch-style input: (batch=2, in_channels=2, length=64)
    x = jax.random.normal(kx, (2, 2, 64), jnp.float32)
    params = init_params(kp, in_channels=2, classes=5)

    out = jax.block_until_ready(resnet18_forward(x, params, use_pallas=True))
    assert out.shape == (2, 2, 5), out.shape

    # Pure-JAX reference with identical math (bf16 matmuls, f32 accumulation).
    ref = jax.block_until_ready(resnet18_forward(x, params, use_pallas=False))
    err = float(jnp.max(jnp.abs(out - ref)))
    ref_mag = float(jnp.max(jnp.abs(ref)))
    if err > 5e-2 + 2e-2 * ref_mag:
        raise AssertionError(f"Pallas/JAX mismatch, max abs err = {err}")

    print("KERNEL_OK")
</pallas_src>

<mosaic_0001>
module attributes {stable_mosaic.version = 11 : i64} {
  func.func @matmul_bias_kernel(%arg0: i32, %arg1: i32, %arg2: i32, %arg3: memref<128x128xbf16, #tpu.memory_space<vmem>>, %arg4: memref<128x128xbf16, #tpu.memory_space<vmem>>, %arg5: memref<1x128xf32, #tpu.memory_space<vmem>>, %arg6: memref<128x128xbf16, #tpu.memory_space<vmem>>, %arg7: memref<128x128xf32, #tpu.memory_space<vmem>>) attributes {dimension_semantics = [#tpu.dimension_semantics<parallel>, #tpu.dimension_semantics<parallel>, #tpu.dimension_semantics<arbitrary>], iteration_bounds = array<i64: 1, 1, 1>, scalar_prefetch = 0 : i64, scratch_operands = 1 : i64, tpu.core_type = #tpu.core_type<tc>, window_params = [{transform_indices = @transform_0, window_bounds = array<i64: 128, 128>}, {transform_indices = @transform_1, window_bounds = array<i64: 128, 128>}, {transform_indices = @transform_2, window_bounds = array<i64: 1, 128>}, {transform_indices = @transform_3, window_bounds = array<i64: 128, 128>}]} {
    %c0_i32 = arith.constant 0 : i32
    %0 = arith.cmpi eq, %arg2, %c0_i32 : i32
    %1 = arith.extui %0 : i1 to i32
    %c0_i32_0 = arith.constant 0 : i32
    %2 = arith.cmpi ne, %1, %c0_i32_0 : i32
    scf.if %2 {
      %c0_10 = arith.constant 0 : index
      %c0_11 = arith.constant 0 : index
      %12 = vector.load %arg5[%c0_10, %c0_11] : memref<1x128xf32, #tpu.memory_space<vmem>>, vector<1x128xf32>
      %13 = vector.shape_cast %12 : vector<1x128xf32> to vector<1x128xf32>
      %14 = vector.broadcast %13 : vector<1x128xf32> to vector<128x128xf32>
      %c0_12 = arith.constant 0 : index
      %c0_13 = arith.constant 0 : index
      %15 = vector.load %arg7[%c0_12, %c0_13] : memref<128x128xf32, #tpu.memory_space<vmem>>, vector<128x128xf32>
      tpu.vector_store %arg7[%c0_12, %c0_13], %14 {strides = array<i32>} : memref<128x128xf32, #tpu.memory_space<vmem>>, vector<128x128xf32>,
    } else {
    }
    %c0 = arith.constant 0 : index
    %c0_1 = arith.constant 0 : index
    %3 = vector.load %arg7[%c0, %c0_1] : memref<128x128xf32, #tpu.memory_space<vmem>>, vector<128x128xf32>
    %c0_2 = arith.constant 0 : index
    %c0_3 = arith.constant 0 : index
    %4 = vector.load %arg3[%c0_2, %c0_3] : memref<128x128xbf16, #tpu.memory_space<vmem>>, vector<128x128xbf16>
    %c0_4 = arith.constant 0 : index
    %c0_5 = arith.constant 0 : index
    %5 = vector.load %arg4[%c0_4, %c0_5] : memref<128x128xbf16, #tpu.memory_space<vmem>>, vector<128x128xbf16>
    %cst = arith.constant dense<0.000000e+00> : vector<128x128xf32>
    %6 = tpu.matmul %4, %5, %cst {dimension_numbers = #tpu.dot_dimension_numbers<[1], [0], [0], [1], [0, 0, 1, 1], [], []>} : vector<128x128xbf16>, vector<128x128xbf16>, vector<128x128xf32> -> vector<128x128xf32>
    %7 = arith.addf %3, %6 : vector<128x128xf32>
    %c0_6 = arith.constant 0 : index
    %c0_7 = arith.constant 0 : index
    %8 = vector.load %arg7[%c0_6, %c0_7] : memref<128x128xf32, #tpu.memory_space<vmem>>, vector<128x128xf32>
    tpu.vector_store %arg7[%c0_6, %c0_7], %7 {strides = array<i32>} : memref<128x128xf32, #tpu.memory_space<vmem>>, vector<128x128xf32>,
    %c0_i32_8 = arith.constant 0 : i32
    %9 = arith.cmpi eq, %arg2, %c0_i32_8 : i32
    %10 = arith.extui %9 : i1 to i32
    %c0_i32_9 = arith.constant 0 : i32
    %11 = arith.cmpi ne, %10, %c0_i32_9 : i32
    scf.if %11 {
      %c0_10 = arith.constant 0 : index
      %c0_11 = arith.constant 0 : index
      %12 = vector.load %arg7[%c0_10, %c0_11] : memref<128x128xf32, #tpu.memory_space<vmem>>, vector<128x128xf32>
      %13 = arith.truncf %12 : vector<128x128xf32> to vector<128x128xbf16>
      %c0_12 = arith.constant 0 : index
      %c0_13 = arith.constant 0 : index
      %14 = vector.load %arg6[%c0_12, %c0_13] : memref<128x128xbf16, #tpu.memory_space<vmem>>, vector<128x128xbf16>
      tpu.vector_store %arg6[%c0_12, %c0_13], %13 {strides = array<i32>} : memref<128x128xbf16, #tpu.memory_space<vmem>>, vector<128x128xbf16>,
    } else {
    }
    return
  }
  func.func @transform_0(%arg0: i32, %arg1: i32, %arg2: i32) -> (i32, i32) {
    %c0_i32 = arith.constant 0 : i32
    return %arg0, %arg2 : i32, i32
  }
  func.func @transform_1(%arg0: i32, %arg1: i32, %arg2: i32) -> (i32, i32) {
    %c0_i32 = arith.constant 0 : i32
    return %arg2, %arg1 : i32, i32
  }
  func.func @transform_2(%arg0: i32, %arg1: i32, %arg2: i32) -> (i32, i32) {
    %c0_i32 = arith.constant 0 : i32
    %c0_i32_0 = arith.constant 0 : i32
    return %c0_i32, %arg1 : i32, i32
  }
  func.func @transform_3(%arg0: i32, %arg1: i32, %arg2: i32) -> (i32, i32) {
    %c0_i32 = arith.constant 0 : i32
    return %arg0, %arg1 : i32, i32
  }
}

</mosaic_0001>

<llo_original>
// kernel: tpu_custom_call.1
$region0: #{tpu_custom_call.1}
  #allocation0 [shape = 'u32[]', space=smem, size = 0x4, offset = 0x4, fixed_abs, tag = 'smem constant byte address 0x4 - core index']
  #allocation1 [shape = 'u32[144,128]{1,0:T(1,128)}', space=vmem, size = 0x12000, scoped, tag = 'internal scratch']
  #allocation2 [shape = 'f32[128,128]{1,0:T(8,128)}', space=vmem, size = 0x10000, scoped, tag = 'scratch operand']
  %s0 = inlined_call_operand.hbm [shape: bf16[128,128], index: 0, kind: input, shape index: {}]
  %s1 = inlined_call_operand.hbm [shape: bf16[128,128], index: 1, kind: input, shape index: {}]
  %s2 = inlined_call_operand.vmem [shape: f32[1,128], index: 2, kind: input, shape index: {}]
  %s3 = inlined_call_operand.hbm [shape: bf16[128,128], index: 3, kind: output, shape index: {}]
  %s4 = sld [smem:[#allocation0]]
  $region38: #{tpu_custom_call.1} parent=0
    _
  %s6 = ssub.s32 1, %s4
  %s7 = scalar_select 0, %s6, %s4
  $region1: #{tpu_custom_call.1} parent=0
    #allocation3 [shape = 'u8[32768]{0}', space=vmem, size = 0x8000, scoped, tag = 'input window, operand 0, single buffered']
    #allocation4 [shape = 's32[1]{0}', space=sflag, size = 0x4, scoped, tag = 'scoped memory for tpu_custom_call.1']
    #allocation5 [shape = 's32[1]{0}', space=sflag, size = 0x4, scoped, tag = 'scoped memory for tpu_custom_call.1']
    #allocation6 [shape = 'u8[32768]{0}', space=vmem, size = 0x8000, scoped, tag = 'input window, operand 1, single buffered']
    #allocation7 [shape = 's32[1]{0}', space=sflag, size = 0x4, scoped, tag = 'scoped memory for tpu_custom_call.1']
    #allocation8 [shape = 'u8[32768]{0}', space=vmem, size = 0x8000, scoped, tag = 'output window, operand 0, single buffered']
    %8 = vsyncpa [#allocation4], 0
    %9 = vsyncpa [#allocation7], 0
    %10 = vsyncpa [#allocation5], 0
    // Predicated region
    $region2: #{tpu_custom_call.1} parent=1 // pred_check
      _
    $region3: #{tpu_custom_call.1} parent=1 // pred_check_branch
      %12 = sbr.rel (0) target = $region5
    $region4: #{tpu_custom_call.1} parent=1 // pred_region
      %s14 = ssub.s32 1024, 1024
      %15 = vsyncadd [#allocation4], %s14
      %s16 = sshll.u32 [#allocation3], 4
      %s17 = int_to_ptr.vmem [resolvable:$true] %s16
      %22 = dma.hbm_to_vmem [thread:$0]  %s0, 1024, %s17, [#allocation4], 64, 64, 4
    $region5: #{tpu_custom_call.1} parent=1 // pred_fallthru
      _
    // Predicated region
    $region6: #{tpu_custom_call.1} parent=1 // pred_check
      _
    $region7: #{tpu_custom_call.1} parent=1 // pred_check_branch
      %24 = sbr.rel (0) target = $region9
    $region8: #{tpu_custom_call.1} parent=1 // pred_region
      %s26 = ssub.s32 1024, 1024
      %27 = vsyncadd [#allocation7], %s26
      %s28 = sshll.u32 [#allocation6], 4
      %s29 = int_to_ptr.vmem [resolvable:$true] %s28
      %34 = dma.hbm_to_vmem [thread:$0]  %s1, 1024, %s29, [#allocation7], 64, 64, 4
    $region9: #{tpu_custom_call.1} parent=1 // pred_fallthru
      _
    // Predicated region
    $region10: #{tpu_custom_call.1} parent=1 // pred_check
      _
    $region11: #{tpu_custom_call.1} parent=1 // pred_check_branch
      %36 = sbr.rel (0) target = $region13
    $region12: #{tpu_custom_call.1} parent=1 // pred_region
      _
    $region13: #{tpu_custom_call.1} parent=1 // pred_fallthru
      _
    // Predicated region
    $region14: #{tpu_custom_call.1} parent=1 // pred_check
      _
    $region15: #{tpu_custom_call.1} parent=1 // pred_check_branch
      %38 = sbr.rel (0) target = $region17
    $region16: #{tpu_custom_call.1} parent=1 // pred_region
      %39 = dma.done [#allocation4], 1024
    $region17: #{tpu_custom_call.1} parent=1 // pred_fallthru
      _
    // Predicated region
    $region18: #{tpu_custom_call.1} parent=1 // pred_check
      _
    $region19: #{tpu_custom_call.1} parent=1 // pred_check_branch
      %41 = sbr.rel (0) target = $region21
    $region20: #{tpu_custom_call.1} parent=1 // pred_region
      %42 = dma.done [#allocation7], 1024
    $region21: #{tpu_custom_call.1} parent=1 // pred_fallthru
      _
    %p44 = scmp.eq.s32.totalorder 0, 0
    // Predicated region
    $region22: #{tpu_custom_call.1} parent=1 // pred_check
      %p45 = pneg %p44
    $region23: #{tpu_custom_call.1} parent=1 // pred_check_branch
      %47 = sbr.rel (%p45) target = $region25
    $region24: #{tpu_custom_call.1} parent=1 // pred_region
      %v48 = vld [vmem:[%s2] sm:$0x1]
      %v50 = vlaneseq
      %v51 = vshrl.u32 %v50, 7
      %v52 = vsub.s32 0, %v51
      %v53 = vrot.slane %v48, %v52
      %55 = vst [vmem:[#allocation2] sm:$0xff] %v53
      %56 = vst [vmem:[#allocation2 + $0x8] sm:$0xff] %v53
      %57 = vst [vmem:[#allocation2 + $0x10] sm:$0xff] %v53
      %58 = vst [vmem:[#allocation2 + $0x18] sm:$0xff] %v53
      %59 = vst [vmem:[#allocation2 + $0x20] sm:$0xff] %v53
      %60 = vst [vmem:[#allocation2 + $0x28] sm:$0xff] %v53
      %61 = vst [vmem:[#allocation2 + $0x30] sm:$0xff] %v53
      %62 = vst [vmem:[#allocation2 + $0x38] sm:$0xff] %v53
      %63 = vst [vmem:[#allocation2 + $0x40] sm:$0xff] %v53
      %64 = vst [vmem:[#allocation2 + $0x48] sm:$0xff] %v53
      %65 = vst [vmem:[#allocation2 + $0x50] sm:$0xff] %v53
      %66 = vst [vmem:[#allocation2 + $0x58] sm:$0xff] %v53
      %67 = vst [vmem:[#allocation2 + $0x60] sm:$0xff] %v53
      %68 = vst [vmem:[#allocation2 + $0x68] sm:$0xff] %v53
      %69 = vst [vmem:[#allocation2 + $0x70] sm:$0xff] %v53
      %70 = vst [vmem:[#allocation2 + $0x78] sm:$0xff] %v53
    $region25: #{tpu_custom_call.1} parent=1 // pred_fallthru
      _
    %v71 = vld [vmem:[#allocation2] sm:$0xff]
    %v72 = vld [vmem:[#allocation2 + $0x8] sm:$0xff]
    %v73 = vld [vmem:[#allocation2 + $0x10] sm:$0xff]
    %v74 = vld [vmem:[#allocation2 + $0x18] sm:$0xff]
    %v75 = vld [vmem:[#allocation2 + $0x20] sm:$0xff]
    %v76 = vld [vmem:[#allocation2 + $0x28] sm:$0xff]
    %v77 = vld [vmem:[#allocation2 + $0x30] sm:$0xff]
    %v78 = vld [vmem:[#allocation2 + $0x38] sm:$0xff]
    %v79 = vld [vmem:[#allocation2 + $0x40] sm:$0xff]
    %v80 = vld [vmem:[#allocation2 + $0x48] sm:$0xff]
    %v81 = vld [vmem:[#allocation2 + $0x50] sm:$0xff]
    %v82 = vld [vmem:[#allocation2 + $0x58] sm:$0xff]
    %v83 = vld [vmem:[#allocation2 + $0x60] sm:$0xff]
    %v84 = vld [vmem:[#allocation2 + $0x68] sm:$0xff]
    %v85 = vld [vmem:[#allocation2 + $0x70] sm:$0xff]
    %v86 = vld [vmem:[#allocation2 + $0x78] sm:$0xff]
    %v87 = vld [vmem:[#allocation3] sm:$0xf]
    %v88 = vld [vmem:[#allocation3 + $0x4] sm:$0xf]
    %v89 = vld [vmem:[#allocation3 + $0x8] sm:$0xf]
    %v90 = vld [vmem:[#allocation3 + $0xc] sm:$0xf]
    %v91 = vld [vmem:[#allocation3 + $0x10] sm:$0xf]
    %v92 = vld [vmem:[#allocation3 + $0x14] sm:$0xf]
    %v93 = vld [vmem:[#allocation3 + $0x18] sm:$0xf]
    %v94 = vld [vmem:[#allocation3 + $0x1c] sm:$0xf]
    %v95 = vld [vmem:[#allocation3 + $0x20] sm:$0xf]
    %v96 = vld [vmem:[#allocation3 + $0x24] sm:$0xf]
    %v97 = vld [vmem:[#allocation3 + $0x28] sm:$0xf]
    %v98 = vld [vmem:[#allocation3 + $0x2c] sm:$0xf]
    %v99 = vld [vmem:[#allocation3 + $0x30] sm:$0xf]
    %v100 = vld [vmem:[#allocation3 + $0x34] sm:$0xf]
    %v101 = vld [vmem:[#allocation3 + $0x38] sm:$0xf]
    %v102 = vld [vmem:[#allocation3 + $0x3c] sm:$0xf]
    %v103 = vld [vmem:[#allocation6] sm:$0xf]
    %v104 = vld [vmem:[#allocation6 + $0x4] sm:$0xf]
    %v105 = vld [vmem:[#allocation6 + $0x8] sm:$0xf]
    %v106 = vld [vmem:[#allocation6 + $0xc] sm:$0xf]
    %v107 = vld [vmem:[#allocation6 + $0x10] sm:$0xf]
    %v108 = vld [vmem:[#allocation6 + $0x14] sm:$0xf]
    %v109 = vld [vmem:[#allocation6 + $0x18] sm:$0xf]
    %v110 = vld [vmem:[#allocation6 + $0x1c] sm:$0xf]
    %v111 = vld [vmem:[#allocation6 + $0x20] sm:$0xf]
    %v112 = vld [vmem:[#allocation6 + $0x24] sm:$0xf]
    %v113 = vld [vmem:[#allocation6 + $0x28] sm:$0xf]
    %v114 = vld [vmem:[#allocation6 + $0x2c] sm:$0xf]
    %v115 = vld [vmem:[#allocation6 + $0x30] sm:$0xf]
    %v116 = vld [vmem:[#allocation6 + $0x34] sm:$0xf]
    %v117 = vld [vmem:[#allocation6 + $0x38] sm:$0xf]
    %v118 = vld [vmem:[#allocation6 + $0x3c] sm:$0xf]
    %v135 = vunpack.c.l.b16 %v87
    %v136 = vunpack.c.l.b16 %v88
    %v137 = vunpack.c.l.b16 %v89
    %v138 = vunpack.c.l.b16 %v90
    %v139 = vunpack.c.l.b16 %v91
    %v140 = vunpack.c.l.b16 %v92
    %v141 = vunpack.c.l.b16 %v93
    %v142 = vunpack.c.l.b16 %v94
    %v143 = vunpack.c.l.b16 %v95
    %v144 = vunpack.c.l.b16 %v96
    %v145 = vunpack.c.l.b16 %v97
    %v146 = vunpack.c.l.b16 %v98
    %v147 = vunpack.c.l.b16 %v99
    %v148 = vunpack.c.l.b16 %v100
    %v149 = vunpack.c.l.b16 %v101
    %v150 = vunpack.c.l.b16 %v102
    %v151 = vpack.c.b16 %v136, %v135
    %v152 = vpack.c.b16 %v138, %v137
    %v153 = vpack.c.b16 %v140, %v139
    %v154 = vpack.c.b16 %v142, %v141
    %v155 = vpack.c.b16 %v144, %v143
    %v156 = vpack.c.b16 %v146, %v145
    %v157 = vpack.c.b16 %v148, %v147
    %v158 = vpack.c.b16 %v150, %v149
    %v183 = vunpack.c.l.b16 %v103
    %v184 = vunpack.c.l.b16 %v104
    %v185 = vunpack.c.l.b16 %v105
    %v186 = vunpack.c.l.b16 %v106
    %v187 = vunpack.c.l.b16 %v107
    %v188 = vunpack.c.l.b16 %v108
    %v189 = vunpack.c.l.b16 %v109
    %v190 = vunpack.c.l.b16 %v110
    %v191 = vunpack.c.l.b16 %v111
    %v192 = vunpack.c.l.b16 %v112
    %v193 = vunpack.c.l.b16 %v113
    %v194 = vunpack.c.l.b16 %v114
    %v195 = vunpack.c.l.b16 %v115
    %v196 = vunpack.c.l.b16 %v116
    %v197 = vunpack.c.l.b16 %v117
    %v198 = vunpack.c.l.b16 %v118
    %v199 = vpack.c.b16 %v184, %v183
    %v200 = vpack.c.b16 %v186, %v185
    %v201 = vpack.c.b16 %v188, %v187
    %v202 = vpack.c.b16 %v190, %v189
    %v203 = vpack.c.b16 %v192, %v191
    %v204 = vpack.c.b16 %v194, %v193
    %v205 = vpack.c.b16 %v196, %v195
    %v206 = vpack.c.b16 %v198, %v197
    %215 = vmatprep.subr.bf16.mxu0 0
    %216 = vmatpush1.bf16.msra.mxu0 %v199
    %217 = vmatprep.subr.bf16.mxu0 0
    %218 = vmatpush1.bf16.msra.mxu0 %v200
    %219 = vmatprep.subr.bf16.mxu0 0
    %220 = vmatpush1.bf16.msra.mxu0 %v201
    %221 = vmatprep.subr.bf16.mxu0 0
    %222 = vmatpush1.bf16.msra.mxu0 %v202
    %223 = vmatprep.subr.bf16.mxu0 0
    %224 = vmatpush1.bf16.msra.mxu0 %v203
    %225 = vmatprep.subr.bf16.mxu0 0
    %226 = vmatpush1.bf16.msra.mxu0 %v204
    %227 = vmatprep.subr.bf16.mxu0 0
    %228 = vmatpush1.bf16.msra.mxu0 %v205
    %229 = vmatprep.subr.bf16.mxu0 0
    %230 = vmatpush1.bf16.msra.mxu0 %v206
    %231 = vmatprep.subr.bf16.mxu0 0
    %232 = vmatpush1.bf16.msra.mxu0 0
    %233 = vmatprep.subr.bf16.mxu0 0
    %234 = vmatpush1.bf16.msra.mxu0 0
    %235 = vmatprep.subr.bf16.mxu0 0
    %236 = vmatpush1.bf16.msra.mxu0 0
    %237 = vmatprep.subr.bf16.mxu0 0
    %238 = vmatpush1.bf16.msra.mxu0 0
    %239 = vmatprep.subr.bf16.mxu0 0
    %240 = vmatpush1.bf16.msra.mxu0 0
    %241 = vmatprep.subr.bf16.mxu0 0
    %242 = vmatpush1.bf16.msra.mxu0 0
    %243 = vmatprep.subr.bf16.mxu0 0
    %244 = vmatpush1.bf16.msra.mxu0 0
    %245 = vmatprep.subr.bf16.mxu0 0
    %246 = vmatpush1.bf16.msra.mxu0 0
    %247 = vmatprep.mubr.bf16.mxu0 0
    %248 = vmatmul.mubr.bf16.gmra.mrb[0].mxu0 %v151
    %v249 = vpop.f32.mrb[0].mxu0
    %v250 = vadd.f32 0.0, %v249
    %v251 = vpop.f32.mrb[0].mxu0
    %v252 = vpop.f32.mrb[0].mxu0
    %v253 = vadd.f32 0.0, %v252
    %v254 = vpop.f32.mrb[0].mxu0
    %255 = vmatprep.mubr.bf16.mxu0 0
    %256 = vmatmul.mubr.bf16.gmra.mrb[0].mxu0 %v152
    %v257 = vpop.f32.mrb[0].mxu0
    %v258 = vadd.f32 0.0, %v257
    %v259 = vpop.f32.mrb[0].mxu0
    %v260 = vpop.f32.mrb[0].mxu0
    %v261 = vadd.f32 0.0, %v260
    %v262 = vpop.f32.mrb[0].mxu0
    %263 = vmatprep.mubr.bf16.mxu0 0
    %264 = vmatmul.mubr.bf16.gmra.mrb[0].mxu0 %v153
    %v265 = vpop.f32.mrb[0].mxu0
    %v266 = vadd.f32 0.0, %v265
    %v267 = vpop.f32.mrb[0].mxu0
    %v268 = vpop.f32.mrb[0].mxu0
    %v269 = vadd.f32 0.0, %v268
    %v270 = vpop.f32.mrb[0].mxu0
    %271 = vmatprep.mubr.bf16.mxu0 0
    %272 = vmatmul.mubr.bf16.gmra.mrb[0].mxu0 %v154
    %v273 = vpop.f32.mrb[0].mxu0
    %v274 = vadd.f32 0.0, %v273
    %v275 = vpop.f32.mrb[0].mxu0
    %v276 = vpop.f32.mrb[0].mxu0
    %v277 = vadd.f32 0.0, %v276
    %v278 = vpop.f32.mrb[0].mxu0
    %279 = vmatprep.mubr.bf16.mxu0 0
    %280 = vmatmul.mubr.bf16.gmra.mrb[0].mxu0 %v155
    %v281 = vpop.f32.mrb[0].mxu0
    %v282 = vadd.f32 0.0, %v281
    %v283 = vpop.f32.mrb[0].mxu0
    %v284 = vpop.f32.mrb[0].mxu0
    %v285 = vadd.f32 0.0, %v284
    %v286 = vpop.f32.mrb[0].mxu0
    %287 = vmatprep.mubr.bf16.mxu0 0
    %288 = vmatmul.mubr.bf16.gmra.mrb[0].mxu0 %v156
    %v289 = vpop.f32.mrb[0].mxu0
    %v290 = vadd.f32 0.0, %v289
    %v291 = vpop.f32.mrb[0].mxu0
    %v292 = vpop.f32.mrb[0].mxu0
    %v293 = vadd.f32 0.0, %v292
    %v294 = vpop.f32.mrb[0].mxu0
    %295 = vmatprep.mubr.bf16.mxu0 0
    %296 = vmatmul.mubr.bf16.gmra.mrb[0].mxu0 %v157
    %v297 = vpop.f32.mrb[0].mxu0
    %v298 = vadd.f32 0.0, %v297
    %v299 = vpop.f32.mrb[0].mxu0
    %v300 = vpop.f32.mrb[0].mxu0
    %v301 = vadd.f32 0.0, %v300
    %v302 = vpop.f32.mrb[0].mxu0
    %303 = vmatprep.mubr.bf16.mxu0 0
    %304 = vmatmul.mubr.bf16.gmra.mrb[0].mxu0 %v158
    %v305 = vpop.f32.mrb[0].mxu0
    %v306 = vadd.f32 0.0, %v305
    %v307 = vpop.f32.mrb[0].mxu0
    %v308 = vpop.f32.mrb[0].mxu0
    %v309 = vadd.f32 0.0, %v308
    %v310 = vpop.f32.mrb[0].mxu0
    %311 = vdwg.mxu0
    %v312 = vadd.f32 %v71, %v250
    %v313 = vadd.f32 %v72, %v253
    %v314 = vadd.f32 %v73, %v258
    %v315 = vadd.f32 %v74, %v261
    %v316 = vadd.f32 %v75, %v266
    %v317 = vadd.f32 %v76, %v269
    %v318 = vadd.f32 %v77, %v274
    %v319 = vadd.f32 %v78, %v277
    %v320 = vadd.f32 %v79, %v282
    %v321 = vadd.f32 %v80, %v285
    %v322 = vadd.f32 %v81, %v290
    %v323 = vadd.f32 %v82, %v293
    %v324 = vadd.f32 %v83, %v298
    %v325 = vadd.f32 %v84, %v301
    %v326 = vadd.f32 %v85, %v306
    %v327 = vadd.f32 %v86, %v309
    %328 = vst [vmem:[#allocation2] sm:$0xff] %v312
    %329 = vst [vmem:[#allocation2 + $0x8] sm:$0xff] %v313
    %330 = vst [vmem:[#allocation2 + $0x10] sm:$0xff] %v314
    %331 = vst [vmem:[#allocation2 + $0x18] sm:$0xff] %v315
    %332 = vst [vmem:[#allocation2 + $0x20] sm:$0xff] %v316
    %333 = vst [vmem:[#allocation2 + $0x28] sm:$0xff] %v317
    %334 = vst [vmem:[#allocation2 + $0x30] sm:$0xff] %v318
    %335 = vst [vmem:[#allocation2 + $0x38] sm:$0xff] %v319
    %336 = vst [vmem:[#allocation2 + $0x40] sm:$0xff] %v320
    %337 = vst [vmem:[#allocation2 + $0x48] sm:$0xff] %v321
    %338 = vst [vmem:[#allocation2 + $0x50] sm:$0xff] %v322
    %339 = vst [vmem:[#allocation2 + $0x58] sm:$0xff] %v323
    %340 = vst [vmem:[#allocation2 + $0x60] sm:$0xff] %v324
    %341 = vst [vmem:[#allocation2 + $0x68] sm:$0xff] %v325
    %342 = vst [vmem:[#allocation2 + $0x70] sm:$0xff] %v326
    %343 = vst [vmem:[#allocation2 + $0x78] sm:$0xff] %v327
    // Predicated region
    $region26: #{tpu_custom_call.1} parent=1 // pred_check
      %p344 = pneg %p44
    $region27: #{tpu_custom_call.1} parent=1 // pred_check_branch
      %346 = sbr.rel (%p344) target = $region29
    $region28: #{tpu_custom_call.1} parent=1 // pred_region
      %v347 = vld [vmem:[#allocation2] sm:$0xff]
      %v348 = vld [vmem:[#allocation2 + $0x8] sm:$0xff]
      %v349 = vld [vmem:[#allocation2 + $0x10] sm:$0xff]
      %v350 = vld [vmem:[#allocation2 + $0x18] sm:$0xff]
      %v351 = vld [vmem:[#allocation2 + $0x20] sm:$0xff]
      %v352 = vld [vmem:[#allocation2 + $0x28] sm:$0xff]
      %v353 = vld [vmem:[#allocation2 + $0x30] sm:$0xff]
      %v354 = vld [vmem:[#allocation2 + $0x38] sm:$0xff]
      %v355 = vld [vmem:[#allocation2 + $0x40] sm:$0xff]
      %v356 = vld [vmem:[#allocation2 + $0x48] sm:$0xff]
      %v357 = vld [vmem:[#allocation2 + $0x50] sm:$0xff]
      %v358 = vld [vmem:[#allocation2 + $0x58] sm:$0xff]
      %v359 = vld [vmem:[#allocation2 + $0x60] sm:$0xff]
      %v360 = vld [vmem:[#allocation2 + $0x68] sm:$0xff]
      %v361 = vld [vmem:[#allocation2 + $0x70] sm:$0xff]
      %v362 = vld [vmem:[#allocation2 + $0x78] sm:$0xff]
      %v363 = vpack.c.bf16 %v348, %v347
      %v364 = vpack.c.bf16 %v350, %v349
      %v365 = vpack.c.bf16 %v352, %v351
      %v366 = vpack.c.bf16 %v354, %v353
      %v367 = vpack.c.bf16 %v356, %v355
      %v368 = vpack.c.bf16 %v358, %v357
      %v369 = vpack.c.bf16 %v360, %v359
      %v370 = vpack.c.bf16 %v362, %v361
      %v379 = vunpack.c.l.b16 %v363
      %v380 = vunpack.c.h.b16 %v363
      %v381 = vunpack.c.l.b16 %v364
      %v382 = vunpack.c.h.b16 %v364
      %v383 = vunpack.c.l.b16 %v365
      %v384 = vunpack.c.h.b16 %v365
      %v385 = vunpack.c.l.b16 %v366
      %v386 = vunpack.c.h.b16 %v366
      %v387 = vunpack.c.l.b16 %v367
      %v388 = vunpack.c.h.b16 %v367
      %v389 = vunpack.c.l.b16 %v368
      %v390 = vunpack.c.h.b16 %v368
      %v391 = vunpack.c.l.b16 %v369
      %v392 = vunpack.c.h.b16 %v369
      %v393 = vunpack.c.l.b16 %v370
      %v394 = vunpack.c.h.b16 %v370
      %v395 = vpack.c.b16 %v379, %v379
      %v396 = vpack.c.b16 %v380, %v380
      %v397 = vpack.c.b16 %v381, %v381
      %v398 = vpack.c.b16 %v382, %v382
      %v399 = vpack.c.b16 %v383, %v383
      %v400 = vpack.c.b16 %v384, %v384
      %v401 = vpack.c.b16 %v385, %v385
      %v402 = vpack.c.b16 %v386, %v386
      %v403 = vpack.c.b16 %v387, %v387
      %v404 = vpack.c.b16 %v388, %v388
      %v405 = vpack.c.b16 %v389, %v389
      %v406 = vpack.c.b16 %v390, %v390
      %v407 = vpack.c.b16 %v391, %v391
      %v408 = vpack.c.b16 %v392, %v392
      %v409 = vpack.c.b16 %v393, %v393
      %v410 = vpack.c.b16 %v394, %v394
      %427 = vst [vmem:[#allocation8] sm:$0xf] %v395
      %428 = vst [vmem:[#allocation8 + $0x4] sm:$0xf] %v396
      %429 = vst [vmem:[#allocation8 + $0x8] sm:$0xf] %v397
      %430 = vst [vmem:[#allocation8 + $0xc] sm:$0xf] %v398
      %431 = vst [vmem:[#allocation8 + $0x10] sm:$0xf] %v399
      %432 = vst [vmem:[#allocation8 + $0x14] sm:$0xf] %v400
      %433 = vst [vmem:[#allocation8 + $0x18] sm:$0xf] %v401
      %434 = vst [vmem:[#allocation8 + $0x1c] sm:$0xf] %v402
      %435 = vst [vmem:[#allocation8 + $0x20] sm:$0xf] %v403
      %436 = vst [vmem:[#allocation8 + $0x24] sm:$0xf] %v404
      %437 = vst [vmem:[#allocation8 + $0x28] sm:$0xf] %v405
      %438 = vst [vmem:[#allocation8 + $0x2c] sm:$0xf] %v406
      %439 = vst [vmem:[#allocation8 + $0x30] sm:$0xf] %v407
      %440 = vst [vmem:[#allocation8 + $0x34] sm:$0xf] %v408
      %441 = vst [vmem:[#allocation8 + $0x38] sm:$0xf] %v409
      %442 = vst [vmem:[#allocation8 + $0x3c] sm:$0xf] %v410
    $region29: #{tpu_custom_call.1} parent=1 // pred_fallthru
      _
    // Predicated region
    $region30: #{tpu_custom_call.1} parent=1 // pred_check
      _
    $region31: #{tpu_custom_call.1} parent=1 // pred_check_branch
      %444 = sbr.rel (0) target = $region33
    $region32: #{tpu_custom_call.1} parent=1 // pred_region
      %s446 = ssub.s32 1024, 1024
      %447 = vsyncadd [#allocation5], %s446
      %s448 = sshll.u32 [#allocation8], 4
      %s449 = int_to_ptr.vmem [resolvable:$true] %s448
      %454 = dma.vmem_to_hbm [thread:$0]  %s449, 1024, %s3, [#allocation5], 64, 64, 4
    $region33: #{tpu_custom_call.1} parent=1 // pred_fallthru
      _
    // Predicated region
    $region34: #{tpu_custom_call.1} parent=1 // pred_check
      _
    $region35: #{tpu_custom_call.1} parent=1 // pred_check_branch
      %456 = sbr.rel (0) target = $region37
    $region36: #{tpu_custom_call.1} parent=1 // pred_region
      %457 = dma.done [#allocation5], 1024
    $region37: #{tpu_custom_call.1} parent=1 // pred_fallthru
      _
    %458 = vsyncpa [#allocation4], 1
    %459 = vsyncpa [#allocation7], 1
    %460 = vsyncpa [#allocation5], 1

</llo_original>
